<compile_context>
chip_gen: v6e
topology: v6e:2x2x1
jax: 0.10.0
libtpu: 0.0.40
codegen_flags: <defaults>
</compile_context>

<pallas_src>
import numpy as np
import jax
import jax.numpy as jnp
from jax import lax
from jax.experimental import pallas as pl
from jax.experimental.pallas import tpu as pltpu

EPS = 1e-5          # nn.BatchNorm2d default eps
LANE = 128          # TPU lane width


def _rup(x, m):
    return (x + m - 1) // m * m


def _channel_pad(c):
    # v6e/v7x have a 256-wide MXU: pad wide layers to a multiple of 256 so every
    # MXU pass fills the array.  Narrow layers (and v5e's 128-wide MXU) use 128.
    return _rup(c, 256) if c >= 256 else _rup(c, LANE)


# --------------------------------------------------------------------------
# Pass 1/3: per-channel DAR-BN statistics (sum / sum-of-squares / counts for
# the natural and noise subsets).  NB images per grid step, one unmasked (8, C)
# accumulate per step.  Optional 2-way "parallel" split (v7x megacore); the
# tiny (P, 8, C) partial slabs are summed in XLA afterwards.
# --------------------------------------------------------------------------
def _stats_partition(N):
    NB = 1
    for cand in (8, 4, 2):
        if N % cand == 0:
            NB = cand
            break
    steps_total = N // NB
    P = 2 if (steps_total % 2 == 0 and steps_total >= 2) else 1
    steps = steps_total // P
    return NB, P, steps


def _make_stats_kernel(H, W, NB, steps):
    hw = float(H * W)

    def kernel(mask_ref, x_ref, stats_ref):
        p = pl.program_id(0)
        s_idx = pl.program_id(1)

        @pl.when(s_idx == 0)
        def _():
            stats_ref[...] = jnp.zeros_like(stats_ref)

        x = x_ref[...].astype(jnp.float32)                  # (NB, H, W, C)
        C = x.shape[-1]
        sums = jnp.sum(x, axis=(1, 2))                      # (NB, C)
        sqs = jnp.sum(x * x, axis=(1, 2))                   # (NB, C)

        base = (p * steps + s_idx) * NB
        s_nat = jnp.zeros((1, C), jnp.float32)
        s_noi = jnp.zeros((1, C), jnp.float32)
        q_nat = jnp.zeros((1, C), jnp.float32)
        q_noi = jnp.zeros((1, C), jnp.float32)
        c_nat = jnp.float32(0.0)
        c_noi = jnp.float32(0.0)
        for i in range(NB):
            w = mask_ref[base + i].astype(jnp.float32)      # 1.0 if noise image
            s_i = sums[i:i + 1, :]
            q_i = sqs[i:i + 1, :]
            s_noi = s_noi + w * s_i
            s_nat = s_nat + (1.0 - w) * s_i
            q_noi = q_noi + w * q_i
            q_nat = q_nat + (1.0 - w) * q_i
            c_noi = c_noi + w
            c_nat = c_nat + (1.0 - w)

        ones = jnp.ones((1, C), jnp.float32)
        upd = jnp.concatenate([
            s_nat, s_noi, q_nat, q_noi,
            ones * (hw * c_nat),
            ones * (hw * c_noi),
            jnp.zeros((2, C), jnp.float32),
        ], axis=0)                                          # (8, C)
        stats_ref[...] += upd[None]

    return kernel


def _darbn_stats(x_nhwc, mask_i32):
    N, H, W, C = x_nhwc.shape
    NB, P, steps = _stats_partition(N)
    grid_spec = pltpu.PrefetchScalarGridSpec(
        num_scalar_prefetch=1,
        grid=(P, steps),
        in_specs=[pl.BlockSpec((NB, H, W, C),
                               lambda p, s, m: (p * steps + s, 0, 0, 0))],
        out_specs=pl.BlockSpec((1, 8, C), lambda p, s, m: (p, 0, 0)),
    )
    out = pl.pallas_call(
        _make_stats_kernel(H, W, NB, steps),
        out_shape=jax.ShapeDtypeStruct((P, 8, C), jnp.float32),
        grid_spec=grid_spec,
        compiler_params=pltpu.CompilerParams(
            dimension_semantics=("parallel", "arbitrary")),
    )(mask_i32, x_nhwc)
    return out.sum(axis=0) if P > 1 else out.reshape(8, C)


# --------------------------------------------------------------------------
# Pass 2/4: fused DAR-BN + ReLU + 3x3 conv (+ bias, stride, shortcut).
# --------------------------------------------------------------------------
def _make_fused_bn_conv_kernel(H, W, Cin, Cout, stride, shortcut, G):
    Wp = W + 2
    M2 = H * Wp
    Ho = (H - 1) // stride + 1
    Wo = (W - 1) // stride + 1

    def kernel(mask_ref, stats_ref, affine_ref, x_ref, w_ref, b_ref, *rest):
        if shortcut is None:
            o_ref, xn_ref = rest
        elif shortcut == "identity":
            res_ref, o_ref, xn_ref = rest
        else:                                              # "project"
            x0_ref, wsc_ref, bsc_ref, o_ref, xn_ref = rest

        n = pl.program_id(0)

        # ---- DAR-BN scale / shift for this image --------------------------
        st = stats_ref[...]                                # (8, Cin)
        cnt_nat = jnp.maximum(st[4:5, :], 1.0)             # empty-subset guard
        cnt_noi = jnp.maximum(st[5:6, :], 1.0)
        mean_nat = st[0:1, :] / cnt_nat
        mean_noi = st[1:2, :] / cnt_noi
        var_nat = jnp.maximum(st[2:3, :] / cnt_nat - mean_nat * mean_nat, 0.0)
        var_noi = jnp.maximum(st[3:4, :] / cnt_noi - mean_noi * mean_noi, 0.0)
        inv_nat = lax.rsqrt(var_nat + EPS)
        inv_noi = lax.rsqrt(var_noi + EPS)
        w_noi = mask_ref[n].astype(jnp.float32)            # 1.0 if noise image
        w_nat = 1.0 - w_noi
        mean = w_noi * mean_noi + w_nat * mean_nat         # (1, Cin)
        inv = w_noi * inv_noi + w_nat * inv_nat
        scale = affine_ref[0:1, :] * inv
        shift = affine_ref[1:2, :] - mean * scale
        scale = scale.reshape(1, 1, Cin)
        shift = shift.reshape(1, 1, Cin)

        # ---- normalize + ReLU + zero-pad, stored once (bf16) --------------
        xw = x_ref[0].astype(jnp.float32)                  # (H, W, Cin)
        xw = jnp.maximum(xw * scale + shift, 0.0).astype(jnp.bfloat16)
        zc = jnp.zeros((H, 1, Cin), jnp.bfloat16)
        xw = jnp.concatenate([zc, xw, zc], axis=1)         # (H, Wp, Cin)
        xn_ref[pl.ds(G + Wp, M2), :] = xw.reshape(M2, Cin)
        # zero only the pad border the tap windows actually read
        zb = jnp.zeros((Wp + 1, Cin), jnp.bfloat16)
        xn_ref[pl.ds(G - 1, Wp + 1), :] = zb               # top pad
        xn_ref[pl.ds(G + (H + 1) * Wp, Wp + 1), :] = zb    # bottom pad

        # ---- 3x3 conv: 9 contiguous flat-window matmuls, value-chained ----
        acc = None
        for t in range(9):
            dh, dw = divmod(t, 3)
            start = G + dh * Wp + dw - 1
            patch = xn_ref[pl.ds(start, M2), :]            # (M2, Cin) bf16
            contrib = jnp.dot(patch, w_ref[t],
                              preferred_element_type=jnp.float32)
            acc = contrib if acc is None else acc + contrib

        # ---- writeout: drop pad columns, apply stride, bias, shortcut -----
        if stride == 1:
            out = acc.reshape(H, Wp, Cout)[:, 1:1 + W, :]              # (H, W, Cout)
        else:
            # H % stride == 0 and W % stride == 0 (asserted in the wrapper)
            rows = acc.reshape(Ho, stride, Wp, Cout)[:, 0, :, :]       # rows ho*stride
            out = rows[:, 1:1 + Wo * stride, :] \
                .reshape(Ho, Wo, stride, Cout)[:, :, 0, :]             # cols wo*stride

        out = out + b_ref[...].astype(jnp.float32).reshape(1, 1, Cout)

        if shortcut == "identity":
            out = out + res_ref[0].astype(jnp.float32)
        elif shortcut == "project":
            Cres = x0_ref.shape[3]
            x0 = x0_ref[0].astype(jnp.bfloat16).reshape(Ho * Wo, Cres)
            sc = jnp.dot(x0, wsc_ref[...], preferred_element_type=jnp.float32)
            sc = sc + bsc_ref[...].astype(jnp.float32)
            out = out + sc.reshape(Ho, Wo, Cout)

        o_ref[0] = out.astype(o_ref.dtype)

    return kernel


def _fused_darbn_relu_conv3x3(x_nhwc, mask_i32, stats, gamma, beta, w9, b,
                              stride=1, shortcut=None, res=None,
                              wsc=None, bsc=None, out_dtype=jnp.float32):
    """conv3x3(pad=1, stride)(relu(dar_bn(x))) + bias [+ shortcut]."""
    N, H, W, Cin = x_nhwc.shape
    Cout = w9.shape[-1]
    Ho = (H - 1) // stride + 1
    Wo = (W - 1) // stride + 1
    if stride > 1:
        assert H % stride == 0 and W % stride == 0
    G = 8                                                  # guard rows in the flat scratch
    L = _rup(2 * G + (H + 2) * (W + 2), 8)

    affine = jnp.concatenate([gamma.reshape(1, Cin), beta.reshape(1, Cin)], axis=0)

    in_specs = [
        pl.BlockSpec((8, Cin), lambda n, m: (0, 0)),                  # BN stats
        pl.BlockSpec((2, Cin), lambda n, m: (0, 0)),                  # gamma / beta
        pl.BlockSpec((1, H, W, Cin), lambda n, m: (n, 0, 0, 0)),      # activations
        pl.BlockSpec((9, Cin, Cout), lambda n, m: (0, 0, 0)),         # resident weights
        pl.BlockSpec((1, Cout), lambda n, m: (0, 0)),                 # conv bias
    ]
    args = [stats, affine, x_nhwc, w9, b.reshape(1, Cout)]

    if shortcut == "identity":
        in_specs.append(pl.BlockSpec((1, Ho, Wo, Cout), lambda n, m: (n, 0, 0, 0)))
        args.append(res)
    elif shortcut == "project":
        Cres = res.shape[-1]
        in_specs += [
            pl.BlockSpec((1, Ho, Wo, Cres), lambda n, m: (n, 0, 0, 0)),  # pre-strided x
            pl.BlockSpec((Cres, Cout), lambda n, m: (0, 0)),
            pl.BlockSpec((1, Cout), lambda n, m: (0, 0)),
        ]
        args += [res, wsc, bsc.reshape(1, Cout)]

    grid_spec = pltpu.PrefetchScalarGridSpec(
        num_scalar_prefetch=1,
        grid=(N,),
        in_specs=in_specs,
        out_specs=pl.BlockSpec((1, Ho, Wo, Cout), lambda n, m: (n, 0, 0, 0)),
        scratch_shapes=[
            pltpu.VMEM((L, Cin), jnp.bfloat16),            # normalized padded image (flat)
        ],
    )
    return pl.pallas_call(
        _make_fused_bn_conv_kernel(H, W, Cin, Cout, stride, shortcut, G),
        out_shape=jax.ShapeDtypeStruct((N, Ho, Wo, Cout), out_dtype),
        grid_spec=grid_spec,
        compiler_params=pltpu.CompilerParams(
            dimension_semantics=("parallel",),
            vmem_limit_bytes=48 * 1024 * 1024),
    )(mask_i32, *args)


# --------------------------------------------------------------------------
# wide_basic forward
# --------------------------------------------------------------------------
def _prep_conv3x3_weight(w_torch, cin_p, cout_p):
    cout, cin = w_torch.shape[0], w_torch.shape[1]
    w9 = jnp.transpose(w_torch, (2, 3, 1, 0)).reshape(9, cin, cout)   # (9, Cin, Cout)
    w9 = jnp.pad(w9, ((0, 0), (0, cin_p - cin), (0, cout_p - cout)))
    return w9.astype(jnp.bfloat16)


def _pad_vec(v, c, fill=0.0):
    return jnp.pad(v, (0, c - v.shape[0]), constant_values=fill)


def wide_basic_forward(params, x_nchw, noise_mask):
    in_planes, planes, stride = params["in_planes"], params["planes"], params["stride"]
    cin_p, cout_p = _channel_pad(in_planes), _channel_pad(planes)

    x = jnp.transpose(x_nchw, (0, 2, 3, 1)).astype(jnp.float32)       # NCHW -> NHWC
    x_p = jnp.pad(x, ((0, 0), (0, 0), (0, 0), (0, cin_p - in_planes)))
    mask_i32 = noise_mask.astype(jnp.int32)

    g1 = _pad_vec(params["bn1_w"], cin_p, 1.0)
    be1 = _pad_vec(params["bn1_b"], cin_p)
    g2 = _pad_vec(params["bn2_w"], cout_p, 1.0)
    be2 = _pad_vec(params["bn2_b"], cout_p)
    w1 = _prep_conv3x3_weight(params["conv1_w"], cin_p, cout_p)
    cb1 = _pad_vec(params["conv1_b"], cout_p)
    w2 = _prep_conv3x3_weight(params["conv2_w"], cout_p, cout_p)
    cb2 = _pad_vec(params["conv2_b"], cout_p)

    # bn1 + relu + conv1 (stride 1), fused; out1 stored in bf16 (read twice)
    stats1 = _darbn_stats(x_p, mask_i32)
    out1 = _fused_darbn_relu_conv3x3(x_p, mask_i32, stats1, g1, be1, w1, cb1,
                                     stride=1, shortcut=None,
                                     out_dtype=jnp.bfloat16)
    # TODO(synk): nn.Dropout is stochastic in training; treated as eval-mode identity.

    # bn2 + relu + conv2 (stride) + shortcut, fused
    stats2 = _darbn_stats(out1, mask_i32)
    if stride != 1 or in_planes != planes:
        wsc = jnp.transpose(params["sc_w"].reshape(planes, in_planes), (1, 0))
        wsc = jnp.pad(wsc, ((0, cin_p - in_planes), (0, cout_p - planes)))
        wsc = wsc.astype(jnp.bfloat16)
        bsc = _pad_vec(params["sc_b"], cout_p)
        # pre-stride the residual input: only the needed pixels are DMA'd,
        # and no strided indexing is required inside the kernel.
        res = x_p[:, ::stride, ::stride, :]
        out = _fused_darbn_relu_conv3x3(out1, mask_i32, stats2, g2, be2, w2, cb2,
                                        stride=stride, shortcut="project",
                                        res=res, wsc=wsc, bsc=bsc,
                                        out_dtype=jnp.float32)
    else:
        out = _fused_darbn_relu_conv3x3(out1, mask_i32, stats2, g2, be2, w2, cb2,
                                        stride=1, shortcut="identity", res=x_p,
                                        out_dtype=jnp.float32)

    out = out[..., :planes]                                           # drop channel pad
    return jnp.transpose(out, (0, 3, 1, 2))                           # NHWC -> NCHW


# --------------------------------------------------------------------------
# Pure-JAX/NumPy reference (for correctness check only)
# --------------------------------------------------------------------------
def _ref_darbn_relu(x, mask_bool, gamma, beta):   # x NHWC
    mask_bool = np.asarray(mask_bool)
    x = np.asarray(x)
    out = np.array(x)
    for sel in (~mask_bool, mask_bool):
        sub = x[sel]
        mean = sub.mean(axis=(0, 1, 2))
        var = sub.var(axis=(0, 1, 2))
        out[sel] = (sub - mean) / np.sqrt(var + EPS) * np.asarray(gamma) + np.asarray(beta)
    return jnp.maximum(jnp.asarray(out), 0.0)


def _ref_conv(x, w_torch, b, stride, pad):        # x NHWC, w (Cout,Cin,kh,kw)
    w = jnp.transpose(w_torch, (2, 3, 1, 0))
    out = lax.conv_general_dilated(
        x, w, window_strides=(stride, stride),
        padding=[(pad, pad), (pad, pad)],
        dimension_numbers=("NHWC", "HWIO", "NHWC"))
    return out + b


def _ref_forward(params, x_nchw, noise_mask):
    x = jnp.transpose(x_nchw, (0, 2, 3, 1)).astype(jnp.float32)
    stride = params["stride"]
    out = _ref_darbn_relu(x, noise_mask, params["bn1_w"], params["bn1_b"])
    out = _ref_conv(out, params["conv1_w"], params["conv1_b"], 1, 1)
    out = _ref_darbn_relu(out, noise_mask, params["bn2_w"], params["bn2_b"])
    if stride != 1 or params["in_planes"] != params["planes"]:
        sc = _ref_conv(x, params["sc_w"], params["sc_b"], stride, 0)
    else:
        sc = x
    out = _ref_conv(out, params["conv2_w"], params["conv2_b"], stride, 1) + sc
    return jnp.transpose(out, (0, 3, 1, 2))


# --------------------------------------------------------------------------
# Deterministic parameter init + demo
# --------------------------------------------------------------------------
def init_params(key, in_planes, planes, stride):
    ks = jax.random.split(key, 10)
    p = {
        "in_planes": in_planes, "planes": planes, "stride": stride,
        "bn1_w": 1.0 + 0.1 * jax.random.normal(ks[0], (in_planes,), jnp.float32),
        "bn1_b": 0.1 * jax.random.normal(ks[1], (in_planes,), jnp.float32),
        "conv1_w": 0.1 * jax.random.normal(ks[2], (planes, in_planes, 3, 3), jnp.float32),
        "conv1_b": 0.1 * jax.random.normal(ks[3], (planes,), jnp.float32),
        "bn2_w": 1.0 + 0.1 * jax.random.normal(ks[4], (planes,), jnp.float32),
        "bn2_b": 0.1 * jax.random.normal(ks[5], (planes,), jnp.float32),
        "conv2_w": 0.1 * jax.random.normal(ks[6], (planes, planes, 3, 3), jnp.float32),
        "conv2_b": 0.1 * jax.random.normal(ks[7], (planes,), jnp.float32),
    }
    if stride != 1 or in_planes != planes:
        p["sc_w"] = 0.1 * jax.random.normal(ks[8], (planes, in_planes, 1, 1), jnp.float32)
        p["sc_b"] = 0.1 * jax.random.normal(ks[9], (planes,), jnp.float32)
    return p


if __name__ == "__main__":
    key = jax.random.PRNGKey(0)
    # In the original module the mask is loaded from noise_mask.pkl; here it is
    # a deterministic in-script boolean mask (half natural, half noise).
    noise_mask = jnp.array([False, True, False, True])
    N, H, W = 4, 16, 16

    configs = [
        dict(in_planes=8, planes=8, stride=1),   # identity shortcut path
        dict(in_planes=4, planes=8, stride=2),   # 1x1 projection shortcut + stride 2
    ]
    for cfg in configs:
        key, k_x, k_p = jax.random.split(key, 3)
        x = jax.random.normal(k_x, (N, cfg["in_planes"], H, W), jnp.float32)  # NCHW
        params = init_params(k_p, cfg["in_planes"], cfg["planes"], cfg["stride"])

        out = jax.block_until_ready(wide_basic_forward(params, x, noise_mask))
        ref = _ref_forward(params, x, noise_mask)
        np.testing.assert_allclose(np.asarray(out), np.asarray(ref),
                                   rtol=2e-2, atol=5e-2)
        ho = (H - 1) // cfg["stride"] + 1
        assert out.shape == (N, cfg["planes"], ho, ho)

    print("KERNEL_OK")
</pallas_src>

<mosaic_0001>
module attributes {stable_mosaic.version = 11 : i64} {
  func.func @kernel(%arg0: i32, %arg1: i32, %arg2: memref<4xi32, #tpu.memory_space<smem>>, %arg3: memref<4x16x16x128xf32, #tpu.memory_space<vmem>>, %arg4: memref<1x8x128xf32, #tpu.memory_space<vmem>>) attributes {dimension_semantics = [#tpu.dimension_semantics<parallel>, #tpu.dimension_semantics<arbitrary>], iteration_bounds = array<i64: 1, 1>, scalar_prefetch = 1 : i64, scratch_operands = 0 : i64, tpu.core_type = #tpu.core_type<tc>, window_params = [{transform_indices = @transform_0, window_bounds = array<i64: 4, 16, 16, 128>}, {transform_indices = @transform_1, window_bounds = array<i64: 1, 8, 128>}]} {
    %c0_i32 = arith.constant 0 : i32
    %0 = arith.cmpi eq, %arg1, %c0_i32 : i32
    %1 = arith.extui %0 : i1 to i32
    %c0_i32_0 = arith.constant 0 : i32
    %2 = arith.cmpi ne, %1, %c0_i32_0 : i32
    scf.if %2 {
      %cst_35 = arith.constant 0.000000e+00 : f32
      %119 = vector.broadcast %cst_35 : f32 to vector<1x8x128xf32>
      %c0_36 = arith.constant 0 : index
      %c0_37 = arith.constant 0 : index
      %c0_38 = arith.constant 0 : index
      %120 = vector.load %arg4[%c0_36, %c0_37, %c0_38] : memref<1x8x128xf32, #tpu.memory_space<vmem>>, vector<1x8x128xf32>
      tpu.vector_store %arg4[%c0_36, %c0_37, %c0_38], %119 {strides = array<i32>} : memref<1x8x128xf32, #tpu.memory_space<vmem>>, vector<1x8x128xf32>,
    } else {
    }
    %c0 = arith.constant 0 : index
    %c0_1 = arith.constant 0 : index
    %c0_2 = arith.constant 0 : index
    %c0_3 = arith.constant 0 : index
    %3 = vector.load %arg3[%c0, %c0_1, %c0_2, %c0_3] : memref<4x16x16x128xf32, #tpu.memory_space<vmem>>, vector<4x16x16x128xf32>
    %cst = arith.constant dense<0.000000e+00> : vector<4x128xf32>
    %4 = vector.multi_reduction <add>, %3, %cst [1, 2] : vector<4x16x16x128xf32> to vector<4x128xf32>
    %5 = arith.mulf %3, %3 : vector<4x16x16x128xf32>
    %cst_4 = arith.constant dense<0.000000e+00> : vector<4x128xf32>
    %6 = vector.multi_reduction <add>, %5, %cst_4 [1, 2] : vector<4x16x16x128xf32> to vector<4x128xf32>
    %c1_i32 = arith.constant 1 : i32
    %7 = arith.muli %arg0, %c1_i32 : i32
    %8 = arith.addi %7, %arg1 : i32
    %c4_i32 = arith.constant 4 : i32
    %9 = arith.muli %8, %c4_i32 : i32
    %cst_5 = arith.constant 0.000000e+00 : f32
    %10 = vector.broadcast %cst_5 : f32 to vector<1x128xf32>
    %cst_6 = arith.constant 0.000000e+00 : f32
    %11 = vector.broadcast %cst_6 : f32 to vector<1x128xf32>
    %cst_7 = arith.constant 0.000000e+00 : f32
    %12 = vector.broadcast %cst_7 : f32 to vector<1x128xf32>
    %cst_8 = arith.constant 0.000000e+00 : f32
    %13 = vector.broadcast %cst_8 : f32 to vector<1x128xf32>
    %c0_i32_9 = arith.constant 0 : i32
    %14 = arith.addi %9, %c0_i32_9 : i32
    %15 = arith.index_cast %14 : i32 to index
    %16 = memref.load %arg2[%15] : memref<4xi32, #tpu.memory_space<smem>>
    %17 = arith.sitofp %16 : i32 to f32
    %18 = vector.extract_strided_slice %4 {offsets = [0, 0], sizes = [1, 128], strides = [1, 1]} : vector<4x128xf32> to vector<1x128xf32>
    %19 = vector.extract_strided_slice %6 {offsets = [0, 0], sizes = [1, 128], strides = [1, 1]} : vector<4x128xf32> to vector<1x128xf32>
    %20 = vector.broadcast %17 : f32 to vector<1x128xf32>
    %21 = arith.mulf %20, %18 : vector<1x128xf32>
    %22 = arith.addf %11, %21 : vector<1x128xf32>
    %cst_10 = arith.constant 1.000000e+00 : f32
    %23 = arith.subf %cst_10, %17 : f32
    %24 = vector.broadcast %23 : f32 to vector<1x128xf32>
    %25 = arith.mulf %24, %18 : vector<1x128xf32>
    %26 = arith.addf %10, %25 : vector<1x128xf32>
    %27 = vector.broadcast %17 : f32 to vector<1x128xf32>
    %28 = arith.mulf %27, %19 : vector<1x128xf32>
    %29 = arith.addf %13, %28 : vector<1x128xf32>
    %cst_11 = arith.constant 1.000000e+00 : f32
    %30 = arith.subf %cst_11, %17 : f32
    %31 = vector.broadcast %30 : f32 to vector<1x128xf32>
    %32 = arith.mulf %31, %19 : vector<1x128xf32>
    %33 = arith.addf %12, %32 : vector<1x128xf32>
    %cst_12 = arith.constant 0.000000e+00 : f32
    %34 = arith.addf %cst_12, %17 : f32
    %cst_13 = arith.constant 1.000000e+00 : f32
    %35 = arith.subf %cst_13, %17 : f32
    %cst_14 = arith.constant 0.000000e+00 : f32
    %36 = arith.addf %cst_14, %35 : f32
    %c1_i32_15 = arith.constant 1 : i32
    %37 = arith.addi %9, %c1_i32_15 : i32
    %38 = arith.index_cast %37 : i32 to index
    %39 = memref.load %arg2[%38] : memref<4xi32, #tpu.memory_space<smem>>
    %40 = arith.sitofp %39 : i32 to f32
    %41 = vector.extract_strided_slice %4 {offsets = [1, 0], sizes = [1, 128], strides = [1, 1]} : vector<4x128xf32> to vector<1x128xf32>
    %42 = vector.extract_strided_slice %6 {offsets = [1, 0], sizes = [1, 128], strides = [1, 1]} : vector<4x128xf32> to vector<1x128xf32>
    %43 = vector.broadcast %40 : f32 to vector<1x128xf32>
    %44 = arith.mulf %43, %41 : vector<1x128xf32>
    %45 = arith.addf %22, %44 : vector<1x128xf32>
    %cst_16 = arith.constant 1.000000e+00 : f32
    %46 = arith.subf %cst_16, %40 : f32
    %47 = vector.broadcast %46 : f32 to vector<1x128xf32>
    %48 = arith.mulf %47, %41 : vector<1x128xf32>
    %49 = arith.addf %26, %48 : vector<1x128xf32>
    %50 = vector.broadcast %40 : f32 to vector<1x128xf32>
    %51 = arith.mulf %50, %42 : vector<1x128xf32>
    %52 = arith.addf %29, %51 : vector<1x128xf32>
    %cst_17 = arith.constant 1.000000e+00 : f32
    %53 = arith.subf %cst_17, %40 : f32
    %54 = vector.broadcast %53 : f32 to vector<1x128xf32>
    %55 = arith.mulf %54, %42 : vector<1x128xf32>
    %56 = arith.addf %33, %55 : vector<1x128xf32>
    %57 = arith.addf %34, %40 : f32
    %cst_18 = arith.constant 1.000000e+00 : f32
    %58 = arith.subf %cst_18, %40 : f32
    %59 = arith.addf %36, %58 : f32
    %c2_i32 = arith.constant 2 : i32
    %60 = arith.addi %9, %c2_i32 : i32
    %61 = arith.index_cast %60 : i32 to index
    %62 = memref.load %arg2[%61] : memref<4xi32, #tpu.memory_space<smem>>
    %63 = arith.sitofp %62 : i32 to f32
    %64 = vector.extract_strided_slice %4 {offsets = [2, 0], sizes = [1, 128], strides = [1, 1]} : vector<4x128xf32> to vector<1x128xf32>
    %65 = vector.extract_strided_slice %6 {offsets = [2, 0], sizes = [1, 128], strides = [1, 1]} : vector<4x128xf32> to vector<1x128xf32>
    %66 = vector.broadcast %63 : f32 to vector<1x128xf32>
    %67 = arith.mulf %66, %64 : vector<1x128xf32>
    %68 = arith.addf %45, %67 : vector<1x128xf32>
    %cst_19 = arith.constant 1.000000e+00 : f32
    %69 = arith.subf %cst_19, %63 : f32
    %70 = vector.broadcast %69 : f32 to vector<1x128xf32>
    %71 = arith.mulf %70, %64 : vector<1x128xf32>
    %72 = arith.addf %49, %71 : vector<1x128xf32>
    %73 = vector.broadcast %63 : f32 to vector<1x128xf32>
    %74 = arith.mulf %73, %65 : vector<1x128xf32>
    %75 = arith.addf %52, %74 : vector<1x128xf32>
    %cst_20 = arith.constant 1.000000e+00 : f32
    %76 = arith.subf %cst_20, %63 : f32
    %77 = vector.broadcast %76 : f32 to vector<1x128xf32>
    %78 = arith.mulf %77, %65 : vector<1x128xf32>
    %79 = arith.addf %56, %78 : vector<1x128xf32>
    %80 = arith.addf %57, %63 : f32
    %cst_21 = arith.constant 1.000000e+00 : f32
    %81 = arith.subf %cst_21, %63 : f32
    %82 = arith.addf %59, %81 : f32
    %c3_i32 = arith.constant 3 : i32
    %83 = arith.addi %9, %c3_i32 : i32
    %84 = arith.index_cast %83 : i32 to index
    %85 = memref.load %arg2[%84] : memref<4xi32, #tpu.memory_space<smem>>
    %86 = arith.sitofp %85 : i32 to f32
    %87 = vector.extract_strided_slice %4 {offsets = [3, 0], sizes = [1, 128], strides = [1, 1]} : vector<4x128xf32> to vector<1x128xf32>
    %88 = vector.extract_strided_slice %6 {offsets = [3, 0], sizes = [1, 128], strides = [1, 1]} : vector<4x128xf32> to vector<1x128xf32>
    %89 = vector.broadcast %86 : f32 to vector<1x128xf32>
    %90 = arith.mulf %89, %87 : vector<1x128xf32>
    %91 = arith.addf %68, %90 : vector<1x128xf32>
    %cst_22 = arith.constant 1.000000e+00 : f32
    %92 = arith.subf %cst_22, %86 : f32
    %93 = vector.broadcast %92 : f32 to vector<1x128xf32>
    %94 = arith.mulf %93, %87 : vector<1x128xf32>
    %95 = arith.addf %72, %94 : vector<1x128xf32>
    %96 = vector.broadcast %86 : f32 to vector<1x128xf32>
    %97 = arith.mulf %96, %88 : vector<1x128xf32>
    %98 = arith.addf %75, %97 : vector<1x128xf32>
    %cst_23 = arith.constant 1.000000e+00 : f32
    %99 = arith.subf %cst_23, %86 : f32
    %100 = vector.broadcast %99 : f32 to vector<1x128xf32>
    %101 = arith.mulf %100, %88 : vector<1x128xf32>
    %102 = arith.addf %79, %101 : vector<1x128xf32>
    %103 = arith.addf %80, %86 : f32
    %cst_24 = arith.constant 1.000000e+00 : f32
    %104 = arith.subf %cst_24, %86 : f32
    %105 = arith.addf %82, %104 : f32
    %cst_25 = arith.constant 1.000000e+00 : f32
    %106 = vector.broadcast %cst_25 : f32 to vector<1x128xf32>
    %cst_26 = arith.constant 2.560000e+02 : f32
    %107 = arith.mulf %cst_26, %105 : f32
    %108 = vector.broadcast %107 : f32 to vector<1x128xf32>
    %109 = arith.mulf %106, %108 : vector<1x128xf32>
    %cst_27 = arith.constant 2.560000e+02 : f32
    %110 = arith.mulf %cst_27, %103 : f32
    %111 = vector.broadcast %110 : f32 to vector<1x128xf32>
    %112 = arith.mulf %106, %111 : vector<1x128xf32>
    %cst_28 = arith.constant 0.000000e+00 : f32
    %113 = vector.broadcast %cst_28 : f32 to vector<2x128xf32>
    %114 = tpu.concatenate %95, %91, %102, %98, %109, %112, %113 in 0 : vector<1x128xf32>, vector<1x128xf32>, vector<1x128xf32>, vector<1x128xf32>, vector<1x128xf32>, vector<1x128xf32>, vector<2x128xf32> -> vector<8x128xf32>
    %c0_29 = arith.constant 0 : index
    %c0_30 = arith.constant 0 : index
    %c0_31 = arith.constant 0 : index
    %115 = vector.load %arg4[%c0_29, %c0_30, %c0_31] : memref<1x8x128xf32, #tpu.memory_space<vmem>>, vector<1x8x128xf32>
    %116 = vector.shape_cast %114 : vector<8x128xf32> to vector<1x8x128xf32>
    %117 = arith.addf %115, %116 : vector<1x8x128xf32>
    %c0_32 = arith.constant 0 : index
    %c0_33 = arith.constant 0 : index
    %c0_34 = arith.constant 0 : index
    %118 = vector.load %arg4[%c0_32, %c0_33, %c0_34] : memref<1x8x128xf32, #tpu.memory_space<vmem>>, vector<1x8x128xf32>
    tpu.vector_store %arg4[%c0_32, %c0_33, %c0_34], %117 {strides = array<i32>} : memref<1x8x128xf32, #tpu.memory_space<vmem>>, vector<1x8x128xf32>,
    return
  }
  func.func @transform_0(%arg0: i32, %arg1: i32, %arg2: memref<4xi32, #tpu.memory_space<smem>>) -> (i32, i32, i32, i32) {
    %c1_i32 = arith.constant 1 : i32
    %0 = arith.muli %arg0, %c1_i32 : i32
    %1 = arith.addi %0, %arg1 : i32
    %c0_i32 = arith.constant 0 : i32
    %c0_i32_0 = arith.constant 0 : i32
    %c0_i32_1 = arith.constant 0 : i32
    %c0_i32_2 = arith.constant 0 : i32
    return %1, %c0_i32, %c0_i32_0, %c0_i32_1 : i32, i32, i32, i32
  }
  func.func @transform_1(%arg0: i32, %arg1: i32, %arg2: memref<4xi32, #tpu.memory_space<smem>>) -> (i32, i32, i32) {
    %c0_i32 = arith.constant 0 : i32
    %c0_i32_0 = arith.constant 0 : i32
    %c0_i32_1 = arith.constant 0 : i32
    return %arg0, %c0_i32, %c0_i32_0 : i32, i32, i32
  }
}

</mosaic_0001>

<llo_original>
// kernel: tpu_custom_call.1
$region0: #{tpu_custom_call.1}
  #allocation0 [shape = 'u32[]', space=smem, size = 0x4, offset = 0x4, fixed_abs, tag = 'smem constant byte address 0x4 - core index']
  #allocation1 [shape = 'u32[144,128]{1,0:T(1,128)}', space=vmem, size = 0x12000, scoped, tag = 'internal scratch']
  #allocation2 [shape = 's32[1]{0}', space=sflag, size = 0x4, scoped, tag = 'scoped memory for tpu_custom_call.1']
  #allocation3 [shape = 'u8[512]{0}', space=smem, size = 0x200, scoped, tag = 'prefetched SMEM operand 0']
  %s0 = inlined_call_operand.hbm [shape: s32[4], index: 0, kind: input, shape index: {}]
  %s1 = inlined_call_operand.hbm [shape: f32[4,16,16,128], index: 1, kind: input, shape index: {}]
  %s2 = inlined_call_operand.hbm [shape: f32[1,8,128], index: 2, kind: output, shape index: {}]
  %s3 = sld [smem:[#allocation0]]
  $region22: #{tpu_custom_call.1} parent=0
    _
  %s5 = ssub.s32 1, %s3
  %s6 = scalar_select 0, %s5, %s3
  %8 = dma.hbm_to_smem %s0, 16, [#allocation3], [#allocation2]
  %9 = dma.done [#allocation2], 16
  %10 = sfence
  $region1: #{tpu_custom_call.1} parent=0
    #allocation4 [shape = 'u8[524288]{0}', space=vmem, size = 0x80000, scoped, tag = 'input window, operand 1, single buffered']
    #allocation5 [shape = 's32[1]{0}', space=sflag, size = 0x4, scoped, tag = 'scoped memory for tpu_custom_call.1']
    #allocation6 [shape = 's32[1]{0}', space=sflag, size = 0x4, scoped, tag = 'scoped memory for tpu_custom_call.1']
    #allocation7 [shape = 'u8[4096]{0}', space=vmem, size = 0x1000, scoped, tag = 'output window, operand 0, single buffered']
    %11 = vsyncpa [#allocation5], 0
    %12 = vsyncpa [#allocation6], 0
    // Predicated region
    $region2: #{tpu_custom_call.1} parent=1 // pred_check
      _
    $region3: #{tpu_custom_call.1} parent=1 // pred_check_branch
      %14 = sbr.rel (0) target = $region5
    $region4: #{tpu_custom_call.1} parent=1 // pred_region
      %s15 = sadd.s32 0, 0
      %s16 = smul.u32 4, %s15
      %s18 = ssub.s32 16384, 16384
      %19 = vsyncadd [#allocation5], %s18
      %s20 = smul.addr %s16, 32
      %s21 = smul.addr %s20, 128
      %s22 = scalar_lea.hbm %s1, %s21
      %s23 = sshll.u32 [#allocation4], 4
      %s24 = int_to_ptr.vmem [resolvable:$true] %s23
      %29 = dma.hbm_to_vmem [thread:$0]  %s22, 16384, %s24, [#allocation5], 128, 128, 8
    $region5: #{tpu_custom_call.1} parent=1 // pred_fallthru
      _
    // Predicated region
    $region6: #{tpu_custom_call.1} parent=1 // pred_check
      _
    $region7: #{tpu_custom_call.1} parent=1 // pred_check_branch
      %31 = sbr.rel (0) target = $region9
    $region8: #{tpu_custom_call.1} parent=1 // pred_region
      %32 = dma.done [#allocation5], 16384
    $region9: #{tpu_custom_call.1} parent=1 // pred_fallthru
      _
    %s33 = sadd.s32 0, 0
    %s34 = smul.u32 4, %s33
    %p35 = scmp.eq.s32.totalorder 0, 0
    // Predicated region
    $region10: #{tpu_custom_call.1} parent=1 // pred_check
      %p36 = pneg %p35
    $region11: #{tpu_custom_call.1} parent=1 // pred_check_branch
      %38 = sbr.rel (%p36) target = $region13
    $region12: #{tpu_custom_call.1} parent=1 // pred_region
      %39 = vst [vmem:[#allocation7] sm:$0xff] 0.0
    $region13: #{tpu_custom_call.1} parent=1 // pred_fallthru
      _
    %v40 = vld [vmem:[#allocation4] sm:$0xff]
    %v41 = vld [vmem:[#allocation4 + $0x8] sm:$0xff]
    %v42 = vld [vmem:[#allocation4 + $0x10] sm:$0xff]
    %v43 = vld [vmem:[#allocation4 + $0x18] sm:$0xff]
    %v44 = vld [vmem:[#allocation4 + $0x20] sm:$0xff]
    %v45 = vld [vmem:[#allocation4 + $0x28] sm:$0xff]
    %v46 = vld [vmem:[#allocation4 + $0x30] sm:$0xff]
    %v47 = vld [vmem:[#allocation4 + $0x38] sm:$0xff]
    %v48 = vld [vmem:[#allocation4 + $0x40] sm:$0xff]
    %v49 = vld [vmem:[#allocation4 + $0x48] sm:$0xff]
    %v50 = vld [vmem:[#allocation4 + $0x50] sm:$0xff]
    %v51 = vld [vmem:[#allocation4 + $0x58] sm:$0xff]
    %v52 = vld [vmem:[#allocation4 + $0x60] sm:$0xff]
    %v53 = vld [vmem:[#allocation4 + $0x68] sm:$0xff]
    %v54 = vld [vmem:[#allocation4 + $0x70] sm:$0xff]
    %v55 = vld [vmem:[#allocation4 + $0x78] sm:$0xff]
    %v56 = vld [vmem:[#allocation4 + $0x80] sm:$0xff]
    %v57 = vld [vmem:[#allocation4 + $0x88] sm:$0xff]
    %v58 = vld [vmem:[#allocation4 + $0x90] sm:$0xff]
    %v59 = vld [vmem:[#allocation4 + $0x98] sm:$0xff]
    %v60 = vld [vmem:[#allocation4 + $0xa0] sm:$0xff]
    %v61 = vld [vmem:[#allocation4 + $0xa8] sm:$0xff]
    %v62 = vld [vmem:[#allocation4 + $0xb0] sm:$0xff]
    %v63 = vld [vmem:[#allocation4 + $0xb8] sm:$0xff]
    %v64 = vld [vmem:[#allocation4 + $0xc0] sm:$0xff]
    %v65 = vld [vmem:[#allocation4 + $0xc8] sm:$0xff]
    %v66 = vld [vmem:[#allocation4 + $0xd0] sm:$0xff]
    %v67 = vld [vmem:[#allocation4 + $0xd8] sm:$0xff]
    %v68 = vld [vmem:[#allocation4 + $0xe0] sm:$0xff]
    %v69 = vld [vmem:[#allocation4 + $0xe8] sm:$0xff]
    %v70 = vld [vmem:[#allocation4 + $0xf0] sm:$0xff]
    %v71 = vld [vmem:[#allocation4 + $0xf8] sm:$0xff]
    %v72 = vld [vmem:[#allocation4 + $0x100] sm:$0xff]
    %v73 = vld [vmem:[#allocation4 + $0x108] sm:$0xff]
    %v74 = vld [vmem:[#allocation4 + $0x110] sm:$0xff]
    %v75 = vld [vmem:[#allocation4 + $0x118] sm:$0xff]
    %v76 = vld [vmem:[#allocation4 + $0x120] sm:$0xff]
    %v77 = vld [vmem:[#allocation4 + $0x128] sm:$0xff]
    %v78 = vld [vmem:[#allocation4 + $0x130] sm:$0xff]
    %v79 = vld [vmem:[#allocation4 + $0x138] sm:$0xff]
    %v80 = vld [vmem:[#allocation4 + $0x140] sm:$0xff]
    %v81 = vld [vmem:[#allocation4 + $0x148] sm:$0xff]
    %v82 = vld [vmem:[#allocation4 + $0x150] sm:$0xff]
    %v83 = vld [vmem:[#allocation4 + $0x158] sm:$0xff]
    %v84 = vld [vmem:[#allocation4 + $0x160] sm:$0xff]
    %v85 = vld [vmem:[#allocation4 + $0x168] sm:$0xff]
    %v86 = vld [vmem:[#allocation4 + $0x170] sm:$0xff]
    %v87 = vld [vmem:[#allocation4 + $0x178] sm:$0xff]
    %v88 = vld [vmem:[#allocation4 + $0x180] sm:$0xff]
    %v89 = vld [vmem:[#allocation4 + $0x188] sm:$0xff]
    %v90 = vld [vmem:[#allocation4 + $0x190] sm:$0xff]
    %v91 = vld [vmem:[#allocation4 + $0x198] sm:$0xff]
    %v92 = vld [vmem:[#allocation4 + $0x1a0] sm:$0xff]
    %v93 = vld [vmem:[#allocation4 + $0x1a8] sm:$0xff]
    %v94 = vld [vmem:[#allocation4 + $0x1b0] sm:$0xff]
    %v95 = vld [vmem:[#allocation4 + $0x1b8] sm:$0xff]
    %v96 = vld [vmem:[#allocation4 + $0x1c0] sm:$0xff]
    %v97 = vld [vmem:[#allocation4 + $0x1c8] sm:$0xff]
    %v98 = vld [vmem:[#allocation4 + $0x1d0] sm:$0xff]
    %v99 = vld [vmem:[#allocation4 + $0x1d8] sm:$0xff]
    %v100 = vld [vmem:[#allocation4 + $0x1e0] sm:$0xff]
    %v101 = vld [vmem:[#allocation4 + $0x1e8] sm:$0xff]
    %v102 = vld [vmem:[#allocation4 + $0x1f0] sm:$0xff]
    %v103 = vld [vmem:[#allocation4 + $0x1f8] sm:$0xff]
    %v104 = vld [vmem:[#allocation4 + $0x200] sm:$0xff]
    %v105 = vld [vmem:[#allocation4 + $0x208] sm:$0xff]
    %v106 = vld [vmem:[#allocation4 + $0x210] sm:$0xff]
    %v107 = vld [vmem:[#allocation4 + $0x218] sm:$0xff]
    %v108 = vld [vmem:[#allocation4 + $0x220] sm:$0xff]
    %v109 = vld [vmem:[#allocation4 + $0x228] sm:$0xff]
    %v110 = vld [vmem:[#allocation4 + $0x230] sm:$0xff]
    %v111 = vld [vmem:[#allocation4 + $0x238] sm:$0xff]
    %v112 = vld [vmem:[#allocation4 + $0x240] sm:$0xff]
    %v113 = vld [vmem:[#allocation4 + $0x248] sm:$0xff]
    %v114 = vld [vmem:[#allocation4 + $0x250] sm:$0xff]
    %v115 = vld [vmem:[#allocation4 + $0x258] sm:$0xff]
    %v116 = vld [vmem:[#allocation4 + $0x260] sm:$0xff]
    %v117 = vld [vmem:[#allocation4 + $0x268] sm:$0xff]
    %v118 = vld [vmem:[#allocation4 + $0x270] sm:$0xff]
    %v119 = vld [vmem:[#allocation4 + $0x278] sm:$0xff]
    %v120 = vld [vmem:[#allocation4 + $0x280] sm:$0xff]
    %v121 = vld [vmem:[#allocation4 + $0x288] sm:$0xff]
    %v122 = vld [vmem:[#allocation4 + $0x290] sm:$0xff]
    %v123 = vld [vmem:[#allocation4 + $0x298] sm:$0xff]
    %v124 = vld [vmem:[#allocation4 + $0x2a0] sm:$0xff]
    %v125 = vld [vmem:[#allocation4 + $0x2a8] sm:$0xff]
    %v126 = vld [vmem:[#allocation4 + $0x2b0] sm:$0xff]
    %v127 = vld [vmem:[#allocation4 + $0x2b8] sm:$0xff]
    %v128 = vld [vmem:[#allocation4 + $0x2c0] sm:$0xff]
    %v129 = vld [vmem:[#allocation4 + $0x2c8] sm:$0xff]
    %v130 = vld [vmem:[#allocation4 + $0x2d0] sm:$0xff]
    %v131 = vld [vmem:[#allocation4 + $0x2d8] sm:$0xff]
    %v132 = vld [vmem:[#allocation4 + $0x2e0] sm:$0xff]
    %v133 = vld [vmem:[#allocation4 + $0x2e8] sm:$0xff]
    %v134 = vld [vmem:[#allocation4 + $0x2f0] sm:$0xff]
    %v135 = vld [vmem:[#allocation4 + $0x2f8] sm:$0xff]
    %v136 = vld [vmem:[#allocation4 + $0x300] sm:$0xff]
    %v137 = vld [vmem:[#allocation4 + $0x308] sm:$0xff]
    %v138 = vld [vmem:[#allocation4 + $0x310] sm:$0xff]
    %v139 = vld [vmem:[#allocation4 + $0x318] sm:$0xff]
    %v140 = vld [vmem:[#allocation4 + $0x320] sm:$0xff]
    %v141 = vld [vmem:[#allocation4 + $0x328] sm:$0xff]
    %v142 = vld [vmem:[#allocation4 + $0x330] sm:$0xff]
    %v143 = vld [vmem:[#allocation4 + $0x338] sm:$0xff]
    %v144 = vld [vmem:[#allocation4 + $0x340] sm:$0xff]
    %v145 = vld [vmem:[#allocation4 + $0x348] sm:$0xff]
    %v146 = vld [vmem:[#allocation4 + $0x350] sm:$0xff]
    %v147 = vld [vmem:[#allocation4 + $0x358] sm:$0xff]
    %v148 = vld [vmem:[#allocation4 + $0x360] sm:$0xff]
    %v149 = vld [vmem:[#allocation4 + $0x368] sm:$0xff]
    %v150 = vld [vmem:[#allocation4 + $0x370] sm:$0xff]
    %v151 = vld [vmem:[#allocation4 + $0x378] sm:$0xff]
    %v152 = vld [vmem:[#allocation4 + $0x380] sm:$0xff]
    %v153 = vld [vmem:[#allocation4 + $0x388] sm:$0xff]
    %v154 = vld [vmem:[#allocation4 + $0x390] sm:$0xff]
    %v155 = vld [vmem:[#allocation4 + $0x398] sm:$0xff]
    %v156 = vld [vmem:[#allocation4 + $0x3a0] sm:$0xff]
    %v157 = vld [vmem:[#allocation4 + $0x3a8] sm:$0xff]
    %v158 = vld [vmem:[#allocation4 + $0x3b0] sm:$0xff]
    %v159 = vld [vmem:[#allocation4 + $0x3b8] sm:$0xff]
    %v160 = vld [vmem:[#allocation4 + $0x3c0] sm:$0xff]
    %v161 = vld [vmem:[#allocation4 + $0x3c8] sm:$0xff]
    %v162 = vld [vmem:[#allocation4 + $0x3d0] sm:$0xff]
    %v163 = vld [vmem:[#allocation4 + $0x3d8] sm:$0xff]
    %v164 = vld [vmem:[#allocation4 + $0x3e0] sm:$0xff]
    %v165 = vld [vmem:[#allocation4 + $0x3e8] sm:$0xff]
    %v166 = vld [vmem:[#allocation4 + $0x3f0] sm:$0xff]
    %v167 = vld [vmem:[#allocation4 + $0x3f8] sm:$0xff]
    %v168 = vadd.f32 %v40, %v41
    %v169 = vadd.f32 %v168, %v42
    %v170 = vadd.f32 %v169, %v43
    %v171 = vadd.f32 %v170, %v44
    %v172 = vadd.f32 %v171, %v45
    %v173 = vadd.f32 %v172, %v46
    %v174 = vadd.f32 %v173, %v47
    %v175 = vadd.f32 %v174, %v48
    %v176 = vadd.f32 %v175, %v49
    %v177 = vadd.f32 %v176, %v50
    %v178 = vadd.f32 %v177, %v51
    %v179 = vadd.f32 %v178, %v52
    %v180 = vadd.f32 %v179, %v53
    %v181 = vadd.f32 %v180, %v54
    %v182 = vadd.f32 %v181, %v55
    %v183 = vadd.f32 %v182, %v56
    %v184 = vadd.f32 %v183, %v57
    %v185 = vadd.f32 %v184, %v58
    %v186 = vadd.f32 %v185, %v59
    %v187 = vadd.f32 %v186, %v60
    %v188 = vadd.f32 %v187, %v61
    %v189 = vadd.f32 %v188, %v62
    %v190 = vadd.f32 %v189, %v63
    %v191 = vadd.f32 %v190, %v64
    %v192 = vadd.f32 %v191, %v65
    %v193 = vadd.f32 %v192, %v66
    %v194 = vadd.f32 %v193, %v67
    %v195 = vadd.f32 %v194, %v68
    %v196 = vadd.f32 %v195, %v69
    %v197 = vadd.f32 %v196, %v70
    %v198 = vadd.f32 %v197, %v71
    %v199 = vrot.slane %v198, 4
    %v200 = vadd.f32 %v198, %v199
    %v201 = vrot.slane %v200, 2
    %v202 = vadd.f32 %v200, %v201
    %v203 = vrot.slane %v202, 1
    %v204 = vadd.f32 %v202, %v203
    %v205 = vadd.f32 %v72, %v73
    %v206 = vadd.f32 %v205, %v74
    %v207 = vadd.f32 %v206, %v75
    %v208 = vadd.f32 %v207, %v76
    %v209 = vadd.f32 %v208, %v77
    %v210 = vadd.f32 %v209, %v78
    %v211 = vadd.f32 %v210, %v79
    %v212 = vadd.f32 %v211, %v80
    %v213 = vadd.f32 %v212, %v81
    %v214 = vadd.f32 %v213, %v82
    %v215 = vadd.f32 %v214, %v83
    %v216 = vadd.f32 %v215, %v84
    %v217 = vadd.f32 %v216, %v85
    %v218 = vadd.f32 %v217, %v86
    %v219 = vadd.f32 %v218, %v87
    %v220 = vadd.f32 %v219, %v88
    %v221 = vadd.f32 %v220, %v89
    %v222 = vadd.f32 %v221, %v90
    %v223 = vadd.f32 %v222, %v91
    %v224 = vadd.f32 %v223, %v92
    %v225 = vadd.f32 %v224, %v93
    %v226 = vadd.f32 %v225, %v94
    %v227 = vadd.f32 %v226, %v95
    %v228 = vadd.f32 %v227, %v96
    %v229 = vadd.f32 %v228, %v97
    %v230 = vadd.f32 %v229, %v98
    %v231 = vadd.f32 %v230, %v99
    %v232 = vadd.f32 %v231, %v100
    %v233 = vadd.f32 %v232, %v101
    %v234 = vadd.f32 %v233, %v102
    %v235 = vadd.f32 %v234, %v103
    %v236 = vrot.slane %v235, 4
    %v237 = vadd.f32 %v235, %v236
    %v238 = vrot.slane %v237, 2
    %v239 = vadd.f32 %v237, %v238
    %v240 = vrot.slane %v239, 1
    %v241 = vadd.f32 %v239, %v240
    %v242 = vadd.f32 %v104, %v105
    %v243 = vadd.f32 %v242, %v106
    %v244 = vadd.f32 %v243, %v107
    %v245 = vadd.f32 %v244, %v108
    %v246 = vadd.f32 %v245, %v109
    %v247 = vadd.f32 %v246, %v110
    %v248 = vadd.f32 %v247, %v111
    %v249 = vadd.f32 %v248, %v112
    %v250 = vadd.f32 %v249, %v113
    %v251 = vadd.f32 %v250, %v114
    %v252 = vadd.f32 %v251, %v115
    %v253 = vadd.f32 %v252, %v116
    %v254 = vadd.f32 %v253, %v117
    %v255 = vadd.f32 %v254, %v118
    %v256 = vadd.f32 %v255, %v119
    %v257 = vadd.f32 %v256, %v120
    %v258 = vadd.f32 %v257, %v121
    %v259 = vadd.f32 %v258, %v122
    %v260 = vadd.f32 %v259, %v123
    %v261 = vadd.f32 %v260, %v124
    %v262 = vadd.f32 %v261, %v125
    %v263 = vadd.f32 %v262, %v126
    %v264 = vadd.f32 %v263, %v127
    %v265 = vadd.f32 %v264, %v128
    %v266 = vadd.f32 %v265, %v129
    %v267 = vadd.f32 %v266, %v130
    %v268 = vadd.f32 %v267, %v131
    %v269 = vadd.f32 %v268, %v132
    %v270 = vadd.f32 %v269, %v133
    %v271 = vadd.f32 %v270, %v134
    %v272 = vadd.f32 %v271, %v135
    %v273 = vrot.slane %v272, 4
    %v274 = vadd.f32 %v272, %v273
    %v275 = vrot.slane %v274, 2
    %v276 = vadd.f32 %v274, %v275
    %v277 = vrot.slane %v276, 1
    %v278 = vadd.f32 %v276, %v277
    %v279 = vadd.f32 %v136, %v137
    %v280 = vadd.f32 %v279, %v138
    %v281 = vadd.f32 %v280, %v139
    %v282 = vadd.f32 %v281, %v140
    %v283 = vadd.f32 %v282, %v141
    %v284 = vadd.f32 %v283, %v142
    %v285 = vadd.f32 %v284, %v143
    %v286 = vadd.f32 %v285, %v144
    %v287 = vadd.f32 %v286, %v145
    %v288 = vadd.f32 %v287, %v146
    %v289 = vadd.f32 %v288, %v147
    %v290 = vadd.f32 %v289, %v148
    %v291 = vadd.f32 %v290, %v149
    %v292 = vadd.f32 %v291, %v150
    %v293 = vadd.f32 %v292, %v151
    %v294 = vadd.f32 %v293, %v152
    %v295 = vadd.f32 %v294, %v153
    %v296 = vadd.f32 %v295, %v154
    %v297 = vadd.f32 %v296, %v155
    %v298 = vadd.f32 %v297, %v156
    %v299 = vadd.f32 %v298, %v157
    %v300 = vadd.f32 %v299, %v158
    %v301 = vadd.f32 %v300, %v159
    %v302 = vadd.f32 %v301, %v160
    %v303 = vadd.f32 %v302, %v161
    %v304 = vadd.f32 %v303, %v162
    %v305 = vadd.f32 %v304, %v163
    %v306 = vadd.f32 %v305, %v164
    %v307 = vadd.f32 %v306, %v165
    %v308 = vadd.f32 %v307, %v166
    %v309 = vadd.f32 %v308, %v167
    %v310 = vrot.slane %v309, 4
    %v311 = vadd.f32 %v309, %v310
    %v312 = vrot.slane %v311, 2
    %v313 = vadd.f32 %v311, %v312
    %v314 = vrot.slane %v313, 1
    %v315 = vadd.f32 %v313, %v314
    %v316 = vmul.f32 %v40, %v40
    %v317 = vmul.f32 %v41, %v41
    %v318 = vmul.f32 %v42, %v42
    %v319 = vmul.f32 %v43, %v43
    %v320 = vmul.f32 %v44, %v44
    %v321 = vmul.f32 %v45, %v45
    %v322 = vmul.f32 %v46, %v46
    %v323 = vmul.f32 %v47, %v47
    %v324 = vmul.f32 %v48, %v48
    %v325 = vmul.f32 %v49, %v49
    %v326 = vmul.f32 %v50, %v50
    %v327 = vmul.f32 %v51, %v51
    %v328 = vmul.f32 %v52, %v52
    %v329 = vmul.f32 %v53, %v53
    %v330 = vmul.f32 %v54, %v54
    %v331 = vmul.f32 %v55, %v55
    %v332 = vmul.f32 %v56, %v56
    %v333 = vmul.f32 %v57, %v57
    %v334 = vmul.f32 %v58, %v58
    %v335 = vmul.f32 %v59, %v59
    %v336 = vmul.f32 %v60, %v60
    %v337 = vmul.f32 %v61, %v61
    %v338 = vmul.f32 %v62, %v62
    %v339 = vmul.f32 %v63, %v63
    %v340 = vmul.f32 %v64, %v64
    %v341 = vmul.f32 %v65, %v65
    %v342 = vmul.f32 %v66, %v66
    %v343 = vmul.f32 %v67, %v67
    %v344 = vmul.f32 %v68, %v68
    %v345 = vmul.f32 %v69, %v69
    %v346 = vmul.f32 %v70, %v70
    %v347 = vmul.f32 %v71, %v71
    %v348 = vmul.f32 %v72, %v72
    %v349 = vmul.f32 %v73, %v73
    %v350 = vmul.f32 %v74, %v74
    %v351 = vmul.f32 %v75, %v75
    %v352 = vmul.f32 %v76, %v76
    %v353 = vmul.f32 %v77, %v77
    %v354 = vmul.f32 %v78, %v78
    %v355 = vmul.f32 %v79, %v79
    %v356 = vmul.f32 %v80, %v80
    %v357 = vmul.f32 %v81, %v81
    %v358 = vmul.f32 %v82, %v82
    %v359 = vmul.f32 %v83, %v83
    %v360 = vmul.f32 %v84, %v84
    %v361 = vmul.f32 %v85, %v85
    %v362 = vmul.f32 %v86, %v86
    %v363 = vmul.f32 %v87, %v87
    %v364 = vmul.f32 %v88, %v88
    %v365 = vmul.f32 %v89, %v89
    %v366 = vmul.f32 %v90, %v90
    %v367 = vmul.f32 %v91, %v91
    %v368 = vmul.f32 %v92, %v92
    %v369 = vmul.f32 %v93, %v93
    %v370 = vmul.f32 %v94, %v94
    %v371 = vmul.f32 %v95, %v95
    %v372 = vmul.f32 %v96, %v96
    %v373 = vmul.f32 %v97, %v97
    %v374 = vmul.f32 %v98, %v98
    %v375 = vmul.f32 %v99, %v99
    %v376 = vmul.f32 %v100, %v100
    %v377 = vmul.f32 %v101, %v101
    %v378 = vmul.f32 %v102, %v102
    %v379 = vmul.f32 %v103, %v103
    %v380 = vmul.f32 %v104, %v104
    %v381 = vmul.f32 %v105, %v105
    %v382 = vmul.f32 %v106, %v106
    %v383 = vmul.f32 %v107, %v107
    %v384 = vmul.f32 %v108, %v108
    %v385 = vmul.f32 %v109, %v109
    %v386 = vmul.f32 %v110, %v110
    %v387 = vmul.f32 %v111, %v111
    %v388 = vmul.f32 %v112, %v112
    %v389 = vmul.f32 %v113, %v113
    %v390 = vmul.f32 %v114, %v114
    %v391 = vmul.f32 %v115, %v115
    %v392 = vmul.f32 %v116, %v116
    %v393 = vmul.f32 %v117, %v117
    %v394 = vmul.f32 %v118, %v118
    %v395 = vmul.f32 %v119, %v119
    %v396 = vmul.f32 %v120, %v120
    %v397 = vmul.f32 %v121, %v121
    %v398 = vmul.f32 %v122, %v122
    %v399 = vmul.f32 %v123, %v123
    %v400 = vmul.f32 %v124, %v124
    %v401 = vmul.f32 %v125, %v125
    %v402 = vmul.f32 %v126, %v126
    %v403 = vmul.f32 %v127, %v127
    %v404 = vmul.f32 %v128, %v128
    %v405 = vmul.f32 %v129, %v129
    %v406 = vmul.f32 %v130, %v130
    %v407 = vmul.f32 %v131, %v131
    %v408 = vmul.f32 %v132, %v132
    %v409 = vmul.f32 %v133, %v133
    %v410 = vmul.f32 %v134, %v134
    %v411 = vmul.f32 %v135, %v135
    %v412 = vmul.f32 %v136, %v136
    %v413 = vmul.f32 %v137, %v137
    %v414 = vmul.f32 %v138, %v138
    %v415 = vmul.f32 %v139, %v139
    %v416 = vmul.f32 %v140, %v140
    %v417 = vmul.f32 %v141, %v141
    %v418 = vmul.f32 %v142, %v142
    %v419 = vmul.f32 %v143, %v143
    %v420 = vmul.f32 %v144, %v144
    %v421 = vmul.f32 %v145, %v145
    %v422 = vmul.f32 %v146, %v146
    %v423 = vmul.f32 %v147, %v147
    %v424 = vmul.f32 %v148, %v148
    %v425 = vmul.f32 %v149, %v149
    %v426 = vmul.f32 %v150, %v150
    %v427 = vmul.f32 %v151, %v151
    %v428 = vmul.f32 %v152, %v152
    %v429 = vmul.f32 %v153, %v153
    %v430 = vmul.f32 %v154, %v154
    %v431 = vmul.f32 %v155, %v155
    %v432 = vmul.f32 %v156, %v156
    %v433 = vmul.f32 %v157, %v157
    %v434 = vmul.f32 %v158, %v158
    %v435 = vmul.f32 %v159, %v159
    %v436 = vmul.f32 %v160, %v160
    %v437 = vmul.f32 %v161, %v161
    %v438 = vmul.f32 %v162, %v162
    %v439 = vmul.f32 %v163, %v163
    %v440 = vmul.f32 %v164, %v164
    %v441 = vmul.f32 %v165, %v165
    %v442 = vmul.f32 %v166, %v166
    %v443 = vmul.f32 %v167, %v167
    %v444 = vadd.f32 %v316, %v317
    %v445 = vadd.f32 %v444, %v318
    %v446 = vadd.f32 %v445, %v319
    %v447 = vadd.f32 %v446, %v320
    %v448 = vadd.f32 %v447, %v321
    %v449 = vadd.f32 %v448, %v322
    %v450 = vadd.f32 %v449, %v323
    %v451 = vadd.f32 %v450, %v324
    %v452 = vadd.f32 %v451, %v325
    %v453 = vadd.f32 %v452, %v326
    %v454 = vadd.f32 %v453, %v327
    %v455 = vadd.f32 %v454, %v328
    %v456 = vadd.f32 %v455, %v329
    %v457 = vadd.f32 %v456, %v330
    %v458 = vadd.f32 %v457, %v331
    %v459 = vadd.f32 %v458, %v332
    %v460 = vadd.f32 %v459, %v333
    %v461 = vadd.f32 %v460, %v334
    %v462 = vadd.f32 %v461, %v335
    %v463 = vadd.f32 %v462, %v336
    %v464 = vadd.f32 %v463, %v337
    %v465 = vadd.f32 %v464, %v338
    %v466 = vadd.f32 %v465, %v339
    %v467 = vadd.f32 %v466, %v340
    %v468 = vadd.f32 %v467, %v341
    %v469 = vadd.f32 %v468, %v342
    %v470 = vadd.f32 %v469, %v343
    %v471 = vadd.f32 %v470, %v344
    %v472 = vadd.f32 %v471, %v345
    %v473 = vadd.f32 %v472, %v346
    %v474 = vadd.f32 %v473, %v347
    %v475 = vrot.slane %v474, 4
    %v476 = vadd.f32 %v474, %v475
    %v477 = vrot.slane %v476, 2
    %v478 = vadd.f32 %v476, %v477
    %v479 = vrot.slane %v478, 1
    %v480 = vadd.f32 %v478, %v479
    %v481 = vadd.f32 %v348, %v349
    %v482 = vadd.f32 %v481, %v350
    %v483 = vadd.f32 %v482, %v351
    %v484 = vadd.f32 %v483, %v352
    %v485 = vadd.f32 %v484, %v353
    %v486 = vadd.f32 %v485, %v354
    %v487 = vadd.f32 %v486, %v355
    %v488 = vadd.f32 %v487, %v356
    %v489 = vadd.f32 %v488, %v357
    %v490 = vadd.f32 %v489, %v358
    %v491 = vadd.f32 %v490, %v359
    %v492 = vadd.f32 %v491, %v360
    %v493 = vadd.f32 %v492, %v361
    %v494 = vadd.f32 %v493, %v362
    %v495 = vadd.f32 %v494, %v363
    %v496 = vadd.f32 %v495, %v364
    %v497 = vadd.f32 %v496, %v365
    %v498 = vadd.f32 %v497, %v366
    %v499 = vadd.f32 %v498, %v367
    %v500 = vadd.f32 %v499, %v368
    %v501 = vadd.f32 %v500, %v369
    %v502 = vadd.f32 %v501, %v370
    %v503 = vadd.f32 %v502, %v371
    %v504 = vadd.f32 %v503, %v372
    %v505 = vadd.f32 %v504, %v373
    %v506 = vadd.f32 %v505, %v374
    %v507 = vadd.f32 %v506, %v375
    %v508 = vadd.f32 %v507, %v376
    %v509 = vadd.f32 %v508, %v377
    %v510 = vadd.f32 %v509, %v378
    %v511 = vadd.f32 %v510, %v379
    %v512 = vrot.slane %v511, 4
    %v513 = vadd.f32 %v511, %v512
    %v514 = vrot.slane %v513, 2
    %v515 = vadd.f32 %v513, %v514
    %v516 = vrot.slane %v515, 1
    %v517 = vadd.f32 %v515, %v516
    %v518 = vadd.f32 %v380, %v381
    %v519 = vadd.f32 %v518, %v382
    %v520 = vadd.f32 %v519, %v383
    %v521 = vadd.f32 %v520, %v384
    %v522 = vadd.f32 %v521, %v385
    %v523 = vadd.f32 %v522, %v386
    %v524 = vadd.f32 %v523, %v387
    %v525 = vadd.f32 %v524, %v388
    %v526 = vadd.f32 %v525, %v389
    %v527 = vadd.f32 %v526, %v390
    %v528 = vadd.f32 %v527, %v391
    %v529 = vadd.f32 %v528, %v392
    %v530 = vadd.f32 %v529, %v393
    %v531 = vadd.f32 %v530, %v394
    %v532 = vadd.f32 %v531, %v395
    %v533 = vadd.f32 %v532, %v396
    %v534 = vadd.f32 %v533, %v397
    %v535 = vadd.f32 %v534, %v398
    %v536 = vadd.f32 %v535, %v399
    %v537 = vadd.f32 %v536, %v400
    %v538 = vadd.f32 %v537, %v401
    %v539 = vadd.f32 %v538, %v402
    %v540 = vadd.f32 %v539, %v403
    %v541 = vadd.f32 %v540, %v404
    %v542 = vadd.f32 %v541, %v405
    %v543 = vadd.f32 %v542, %v406
    %v544 = vadd.f32 %v543, %v407
    %v545 = vadd.f32 %v544, %v408
    %v546 = vadd.f32 %v545, %v409
    %v547 = vadd.f32 %v546, %v410
    %v548 = vadd.f32 %v547, %v411
    %v549 = vrot.slane %v548, 4
    %v550 = vadd.f32 %v548, %v549
    %v551 = vrot.slane %v550, 2
    %v552 = vadd.f32 %v550, %v551
    %v553 = vrot.slane %v552, 1
    %v554 = vadd.f32 %v552, %v553
    %v555 = vadd.f32 %v412, %v413
    %v556 = vadd.f32 %v555, %v414
    %v557 = vadd.f32 %v556, %v415
    %v558 = vadd.f32 %v557, %v416
    %v559 = vadd.f32 %v558, %v417
    %v560 = vadd.f32 %v559, %v418
    %v561 = vadd.f32 %v560, %v419
    %v562 = vadd.f32 %v561, %v420
    %v563 = vadd.f32 %v562, %v421
    %v564 = vadd.f32 %v563, %v422
    %v565 = vadd.f32 %v564, %v423
    %v566 = vadd.f32 %v565, %v424
    %v567 = vadd.f32 %v566, %v425
    %v568 = vadd.f32 %v567, %v426
    %v569 = vadd.f32 %v568, %v427
    %v570 = vadd.f32 %v569, %v428
    %v571 = vadd.f32 %v570, %v429
    %v572 = vadd.f32 %v571, %v430
    %v573 = vadd.f32 %v572, %v431
    %v574 = vadd.f32 %v573, %v432
    %v575 = vadd.f32 %v574, %v433
    %v576 = vadd.f32 %v575, %v434
    %v577 = vadd.f32 %v576, %v435
    %v578 = vadd.f32 %v577, %v436
    %v579 = vadd.f32 %v578, %v437
    %v580 = vadd.f32 %v579, %v438
    %v581 = vadd.f32 %v580, %v439
    %v582 = vadd.f32 %v581, %v440
    %v583 = vadd.f32 %v582, %v441
    %v584 = vadd.f32 %v583, %v442
    %v585 = vadd.f32 %v584, %v443
    %v586 = vrot.slane %v585, 4
    %v587 = vadd.f32 %v585, %v586
    %v588 = vrot.slane %v587, 2
    %v589 = vadd.f32 %v587, %v588
    %v590 = vrot.slane %v589, 1
    %v591 = vadd.f32 %v589, %v590
    %s592 = sadd.s32 0, 0
    %s593 = smul.u32 %s592, 4
    %s594 = sld [smem:[#allocation3 + %s593]]
    %s595 = scvt.s32.f32 %s594
    %v596 = vstv %s595
    %v597 = vmul.f32 %v596, %v204
    %v598 = vadd.f32 %v597, 0.0
    %s599 = ssub.f32 1.0, %s595
    %v600 = vstv %s599
    %v601 = vmul.f32 %v600, %v204
    %v602 = vadd.f32 %v601, 0.0
    %v603 = vmul.f32 %v596, %v480
    %v604 = vadd.f32 %v603, 0.0
    %v605 = vmul.f32 %v600, %v480
    %v606 = vadd.f32 %v605, 0.0
    %s607 = sadd.f32 %s595, 0.0
    %s608 = sadd.f32 %s599, 0.0
    %s609 = sadd.s32 %s593, 1
    %s610 = sld [smem:[#allocation3 + %s609]]
    %s611 = scvt.s32.f32 %s610
    %v612 = vstv %s611
    %v613 = vmul.f32 %v612, %v241
    %v614 = vadd.f32 %v598, %v613
    %s615 = ssub.f32 1.0, %s611
    %v616 = vstv %s615
    %v617 = vmul.f32 %v616, %v241
    %v618 = vadd.f32 %v602, %v617
    %v619 = vmul.f32 %v612, %v517
    %v620 = vadd.f32 %v604, %v619
    %v621 = vmul.f32 %v616, %v517
    %v622 = vadd.f32 %v606, %v621
    %s623 = sadd.f32 %s607, %s611
    %s624 = sadd.f32 %s608, %s615
    %s625 = sadd.s32 %s593, 2
    %s626 = sld [smem:[#allocation3 + %s625]]
    %s627 = scvt.s32.f32 %s626
    %v628 = vstv %s627
    %v629 = vmul.f32 %v628, %v278
    %v630 = vadd.f32 %v614, %v629
    %s631 = ssub.f32 1.0, %s627
    %v632 = vstv %s631
    %v633 = vmul.f32 %v632, %v278
    %v634 = vadd.f32 %v618, %v633
    %v635 = vmul.f32 %v628, %v554
    %v636 = vadd.f32 %v620, %v635
    %v637 = vmul.f32 %v632, %v554
    %v638 = vadd.f32 %v622, %v637
    %s639 = sadd.f32 %s623, %s627
    %s640 = sadd.f32 %s624, %s631
    %s641 = sadd.s32 %s593, 3
    %s642 = sld [smem:[#allocation3 + %s641]]
    %s643 = scvt.s32.f32 %s642
    %v644 = vstv %s643
    %v645 = vmul.f32 %v644, %v315
    %v646 = vadd.f32 %v630, %v645
    %s647 = ssub.f32 1.0, %s643
    %v648 = vstv %s647
    %v649 = vmul.f32 %v648, %v315
    %v650 = vadd.f32 %v634, %v649
    %v651 = vmul.f32 %v644, %v591
    %v652 = vadd.f32 %v636, %v651
    %v653 = vmul.f32 %v648, %v591
    %v654 = vadd.f32 %v638, %v653
    %s655 = sadd.f32 %s639, %s643
    %s656 = sadd.f32 %s640, %s647
    %s657 = smul.f32 %s656, 256.0
    %v658 = vstv %s657
    %s659 = smul.f32 %s655, 256.0
    %v660 = vstv %s659
    %vm661 = vcmask 1040384
    %v662 = vsel %vm661, %v650, %v646
    %vm663 = vcmask 1041408
    %v664 = vsel %vm663, %v662, %v654
    %vm665 = vcmask 1042432
    %v666 = vsel %vm665, %v664, %v652
    %vm667 = vcmask 1043456
    %v668 = vsel %vm667, %v666, %v658
    %vm669 = vcmask 1044480
    %v670 = vsel %vm669, %v668, %v660
    %vm671 = vcmask 1045504
    %v672 = vsel %vm671, %v670, 0.0
    %v673 = vld [vmem:[#allocation7] sm:$0xff]
    %v674 = vadd.f32 %v673, %v672
    %675 = vst [vmem:[#allocation7] sm:$0xff] %v674
    // Predicated region
    $region14: #{tpu_custom_call.1} parent=1 // pred_check
      _
    $region15: #{tpu_custom_call.1} parent=1 // pred_check_branch
      %677 = sbr.rel (0) target = $region17
    $region16: #{tpu_custom_call.1} parent=1 // pred_region
      %s679 = ssub.s32 128, 128
      %680 = vsyncadd [#allocation6], %s679
      %s682 = sshll.u32 [#allocation7], 4
      %s683 = int_to_ptr.vmem [resolvable:$true] %s682
      %685 = dma.vmem_to_hbm [thread:$0]  %s683, 128, %s2, [#allocation6]
    $region17: #{tpu_custom_call.1} parent=1 // pred_fallthru
      _
    // Predicated region
    $region18: #{tpu_custom_call.1} parent=1 // pred_check
      _
    $region19: #{tpu_custom_call.1} parent=1 // pred_check_branch
      %687 = sbr.rel (0) target = $region21
    $region20: #{tpu_custom_call.1} parent=1 // pred_region
      %688 = dma.done [#allocation6], 128
    $region21: #{tpu_custom_call.1} parent=1 // pred_fallthru
      _
    %689 = vsyncpa [#allocation5], 1
    %690 = vsyncpa [#allocation6], 1

</llo_original>
